<compile_context>
chip_gen: v6e
topology: v6e:2x2x1
jax: 0.10.0
libtpu: 0.0.40
codegen_flags: <defaults>
</compile_context>

<pallas_src>
import functools

import jax
import jax.numpy as jnp
from jax.experimental import pallas as pl
from jax.experimental.pallas import tpu as pltpu

_LANES = 128  # vreg lane width


def _sigmoid_kernel(x_ref, o_ref):
    """Elementwise sigmoid on a lane-dense (tm, 128) tile."""
    x = x_ref[...]
    # exp goes to the EUP slot; add / reciprocal stay on the VPU — all f32.
    y = 1.0 / (1.0 + jnp.exp(-x))
    o_ref[...] = y.astype(o_ref.dtype)


def _pick_row_tile(num_rows):
    """Largest row tile (multiple of 8) that is <= num_rows, capped at 512."""
    for cand in (512, 256, 128, 64, 32, 16, 8):
        if num_rows >= cand:
            return cand
    return 8


@functools.partial(jax.jit, static_argnames=())
def sigmoid_pallas(x):
    """Elementwise sigmoid of an arbitrary-shaped f32 tensor via Pallas."""
    orig_shape = x.shape
    orig_dtype = x.dtype
    total = x.size

    # Re-pack to a lane-dense 2D slab [rows, 128]; pad rows up so the chosen
    # row tile divides evenly (padding is zeros -> sigmoid(0)=0.5, sliced off).
    rows_needed = pl.cdiv(total, _LANES)
    rows_needed = ((rows_needed + 7) // 8) * 8          # sublane-align
    tm = _pick_row_tile(rows_needed)
    rows = ((rows_needed + tm - 1) // tm) * tm
    padded_total = rows * _LANES

    flat = jnp.pad(x.reshape(-1), (0, padded_total - total))
    x2d = flat.reshape(rows, _LANES)

    grid = (rows // tm,)
    bytes_accessed = 2 * padded_total * 4  # read + write, f32
    cost = pl.CostEstimate(
        flops=3 * padded_total,            # neg, add, reciprocal (rough)
        transcendentals=padded_total,      # one exp per element
        bytes_accessed=bytes_accessed,
    )

    out2d = pl.pallas_call(
        _sigmoid_kernel,
        out_shape=jax.ShapeDtypeStruct((rows, _LANES), orig_dtype),
        grid_spec=pltpu.PrefetchScalarGridSpec(
            num_scalar_prefetch=0,
            grid=grid,
            in_specs=[pl.BlockSpec((tm, _LANES), lambda i: (i, 0))],
            out_specs=pl.BlockSpec((tm, _LANES), lambda i: (i, 0)),
        ),
        compiler_params=pltpu.CompilerParams(
            dimension_semantics=("parallel",),
        ),
        cost_estimate=cost,
    )(x2d)

    return out2d.reshape(-1)[:total].reshape(orig_shape)


def post_process_att(outputs, target_sizes):
    """JAX/Pallas port of PostProcess_ATT.forward (inference post-processing).

    outputs: dict with 'pred_logits' of shape [batch, num_queries, num_attrs]
    target_sizes: [batch, 2] array of (img_h, img_w)
    """
    out_att_logits = outputs["pred_logits"]
    assert len(out_att_logits) == len(target_sizes)
    assert target_sizes.shape[1] == 2

    attr_scores = sigmoid_pallas(out_att_logits)

    # scale_fct is computed (as in the original module) but not used in the
    # returned results.
    img_h, img_w = target_sizes[:, 0], target_sizes[:, 1]
    scale_fct = jnp.stack([img_w, img_h, img_w, img_h], axis=1)
    del scale_fct

    # TODO(synk): the original PyTorch code calls results[-1].update(...) on an
    # empty list (a bug); we implement the evident intent: one dict per image.
    results = [
        {"attr_scores": attr_scores[i]} for i in range(attr_scores.shape[0])
    ]
    return results


if __name__ == "__main__":
    key = jax.random.PRNGKey(0)
    batch, num_queries, num_attrs = 2, 8, 16

    k_logits, _ = jax.random.split(key)
    pred_logits = jax.random.normal(
        k_logits, (batch, num_queries, num_attrs), jnp.float32
    )
    target_sizes = jnp.array([[480.0, 640.0], [512.0, 512.0]], jnp.float32)

    outputs = {"pred_logits": pred_logits}
    results = post_process_att(outputs, target_sizes)

    # Block on the Pallas output and check against a pure-JAX reference.
    scores = jnp.stack([r["attr_scores"] for r in results], axis=0)
    scores = jax.block_until_ready(scores)

    ref = jax.nn.sigmoid(pred_logits)
    assert scores.shape == (batch, num_queries, num_attrs), scores.shape
    assert len(results) == batch
    assert jnp.allclose(scores, ref, atol=1e-6, rtol=1e-6), float(
        jnp.max(jnp.abs(scores - ref))
    )

    print("KERNEL_OK")
</pallas_src>

<mosaic_0001>
module attributes {stable_mosaic.version = 11 : i64} {
  func.func @_sigmoid_kernel(%arg0: i32, %arg1: memref<8x128xf32, #tpu.memory_space<vmem>>, %arg2: memref<8x128xf32, #tpu.memory_space<vmem>>) attributes {dimension_semantics = [#tpu.dimension_semantics<parallel>], iteration_bounds = array<i64: 1>, scalar_prefetch = 0 : i64, scratch_operands = 0 : i64, tpu.core_type = #tpu.core_type<tc>, window_params = [{transform_indices = @transform_0, window_bounds = array<i64: 8, 128>}, {transform_indices = @transform_1, window_bounds = array<i64: 8, 128>}]} {
    %c0 = arith.constant 0 : index
    %c0_0 = arith.constant 0 : index
    %0 = vector.load %arg1[%c0, %c0_0] : memref<8x128xf32, #tpu.memory_space<vmem>>, vector<8x128xf32>
    %cst = arith.constant 0.000000e+00 : f32
    %1 = vector.broadcast %cst : f32 to vector<8x128xf32>
    %2 = arith.subf %1, %0 : vector<8x128xf32>
    %3 = math.exp %2 : vector<8x128xf32>
    %cst_1 = arith.constant 1.000000e+00 : f32
    %4 = vector.broadcast %cst_1 : f32 to vector<8x128xf32>
    %5 = arith.addf %4, %3 : vector<8x128xf32>
    %cst_2 = arith.constant 1.000000e+00 : f32
    %6 = vector.broadcast %cst_2 : f32 to vector<8x128xf32>
    %7 = arith.divf %6, %5 : vector<8x128xf32>
    %c0_3 = arith.constant 0 : index
    %c0_4 = arith.constant 0 : index
    %8 = vector.load %arg2[%c0_3, %c0_4] : memref<8x128xf32, #tpu.memory_space<vmem>>, vector<8x128xf32>
    tpu.vector_store %arg2[%c0_3, %c0_4], %7 {strides = array<i32>} : memref<8x128xf32, #tpu.memory_space<vmem>>, vector<8x128xf32>,
    return
  }
  func.func @transform_0(%arg0: i32) -> (i32, i32) {
    %c0_i32 = arith.constant 0 : i32
    %c0_i32_0 = arith.constant 0 : i32
    return %arg0, %c0_i32 : i32, i32
  }
  func.func @transform_1(%arg0: i32) -> (i32, i32) {
    %c0_i32 = arith.constant 0 : i32
    %c0_i32_0 = arith.constant 0 : i32
    return %arg0, %c0_i32 : i32, i32
  }
}

</mosaic_0001>

<llo_original>
// kernel: sigmoid_pallas.1
$region0: #{sigmoid_pallas.1}
  #allocation0 [shape = 'u32[]', space=smem, size = 0x4, offset = 0x4, fixed_abs, tag = 'smem constant byte address 0x4 - core index']
  #allocation1 [shape = 'u32[144,128]{1,0:T(1,128)}', space=vmem, size = 0x12000, scoped, tag = 'internal scratch']
  %s0 = inlined_call_operand.vmem [shape: f32[8,128], index: 0, kind: input, shape index: {}]
  %s1 = inlined_call_operand.vmem [shape: f32[8,128], index: 1, kind: output, shape index: {}]
  %s2 = sld [smem:[#allocation0]]
  $region14: #{sigmoid_pallas.1} parent=0
    _
  %s4 = ssub.s32 1, %s2
  %s5 = scalar_select 0, %s4, %s2
  // Predicated region
  $region2: #{sigmoid_pallas.1} parent=0 // pred_check
    _
  $region3: #{sigmoid_pallas.1} parent=0 // pred_check_branch
    %7 = sbr.rel (0) target = $region5
  $region4: #{sigmoid_pallas.1} parent=0 // pred_region
    _
  $region5: #{sigmoid_pallas.1} parent=0 // pred_fallthru
    _
  %v8 = vld [vmem:[%s0] sm:$0xff]
  %v9 = vsub.f32 0.0, %v8
  %v10 = vmul.f32 %v9, 1.442695
  %v11 = vpow.pop %v10
  %v12 = vadd.f32 %v11, 1.0
  %v13 = vrcp.pop %v12
  %v14 = vmul.f32 1.0, %v13
  %15 = vst [vmem:[%s1] sm:$0xff] %v14
  // Predicated region
  $region6: #{sigmoid_pallas.1} parent=0 // pred_check
    _
  $region7: #{sigmoid_pallas.1} parent=0 // pred_check_branch
    %17 = sbr.rel (0) target = $region9
  $region8: #{sigmoid_pallas.1} parent=0 // pred_region
    _
  $region9: #{sigmoid_pallas.1} parent=0 // pred_fallthru
    _
  // Predicated region
  $region10: #{sigmoid_pallas.1} parent=0 // pred_check
    _
  $region11: #{sigmoid_pallas.1} parent=0 // pred_check_branch
    %19 = sbr.rel (0) target = $region13
  $region12: #{sigmoid_pallas.1} parent=0 // pred_region
    _
  $region13: #{sigmoid_pallas.1} parent=0 // pred_fallthru
    _

</llo_original>
